<compile_context>
chip_gen: v7x
topology: tpu7x:2x2x1
jax: 0.10.0
libtpu: 0.0.40
codegen_flags: <defaults>
</compile_context>

<pallas_src>
import jax
import jax.numpy as jnp
from jax.experimental import pallas as pl
from jax.experimental.pallas import tpu as pltpu


def _round_up(x, m):
    return (x + m - 1) // m * m


def _discriminator_kernel(x_ref, w1_ref, b1_ref, w2_ref, b2_ref,
                          feat_ref, out_ref, acc_ref):
    k = pl.program_id(1)

    @pl.when(k == 0)
    def _():
        acc_ref[...] = jnp.zeros_like(acc_ref)

    # layer 1 partial product on the MXU, f32 accumulation across K tiles.
    acc_ref[...] += jnp.dot(x_ref[...], w1_ref[...],
                            preferred_element_type=jnp.float32)

    @pl.when(k == pl.num_programs(1) - 1)
    def _():
        h = acc_ref[...] + b1_ref[...]                        # (tm, D) f32
        feat = jnp.where(h >= 0, h, jnp.float32(0.01) * h)    # LeakyReLU(0.01)
        feat_ref[...] = feat.astype(feat_ref.dtype)

        # layer 2 (D -> 1) on VPU + XLU: broadcast-mul + lane reduce.
        logit = jnp.sum(feat * w2_ref[...], axis=-1, keepdims=True) + b2_ref[0, 0]
        out_ref[...] = jax.nn.sigmoid(logit).astype(out_ref.dtype)


def discriminator_forward(x, w1_t, b1, w2_row, b2, *, tm=128, tk=None,
                          compute_dtype=jnp.float32):
    """x: (B, D); w1_t: (D, D) (= layer1.weight.T); b1: (1, D);
    w2_row: (1, D) (= layer2.weight); b2: (1, 1)."""
    B, D = x.shape
    assert w1_t.shape == (D, D) and b1.shape == (1, D)
    assert w2_row.shape == (1, D) and b2.shape == (1, 1)

    # ---- tile sizes -------------------------------------------------------
    tm_eff = min(tm, _round_up(B, 8))        # at least one sublane tile of rows
    B_pad = _round_up(B, tm_eff)
    if tk is None:
        tk = D if D <= 1024 else 512         # stream w1 in bounded K-slabs when large
    if D % tk != 0:
        tk = D
    grid = (B_pad // tm_eff, D // tk)

    # ---- pad batch, cast matmul operands ----------------------------------
    xp = x.astype(compute_dtype)
    if B_pad != B:
        xp = jnp.pad(xp, ((0, B_pad - B), (0, 0)))
    w1c = w1_t.astype(compute_dtype)

    cost = pl.CostEstimate(
        flops=2 * B_pad * D * D + 2 * B_pad * D,
        transcendentals=B_pad,
        bytes_accessed=4 * (B_pad * D + D * D + 2 * D + 1 + B_pad * D + B_pad),
    )

    feat, out = pl.pallas_call(
        _discriminator_kernel,
        out_shape=(
            jax.ShapeDtypeStruct((B_pad, D), jnp.float32),   # features
            jax.ShapeDtypeStruct((B_pad, 1), jnp.float32),   # sigmoid output
        ),
        grid=grid,
        in_specs=[
            pl.BlockSpec((tm_eff, tk), lambda i, k: (i, k)),     # x tile
            pl.BlockSpec((tk, D), lambda i, k: (k, 0)),          # w1 K-slab
            pl.BlockSpec((1, D), lambda i, k: (0, 0)),           # b1 (resident)
            pl.BlockSpec((1, D), lambda i, k: (0, 0)),           # w2 row (resident)
            pl.BlockSpec(memory_space=pltpu.MemorySpace.SMEM),   # b2 scalar
        ],
        out_specs=(
            pl.BlockSpec((tm_eff, D), lambda i, k: (i, 0)),
            pl.BlockSpec((tm_eff, 1), lambda i, k: (i, 0)),
        ),
        scratch_shapes=[pltpu.VMEM((tm_eff, D), jnp.float32)],
        compiler_params=pltpu.CompilerParams(
            dimension_semantics=("parallel", "arbitrary"),
            vmem_limit_bytes=48 * 1024 * 1024,
        ),
        cost_estimate=cost,
    )(xp, w1c, b1.astype(jnp.float32), w2_row.astype(jnp.float32),
      b2.astype(jnp.float32))

    if B_pad != B:
        feat, out = feat[:B], out[:B]
    return feat, out


def init_params(key, input_size):
    """Deterministic init mimicking nn.Linear default (uniform +/- 1/sqrt(fan_in))."""
    k1, k2, k3, k4 = jax.random.split(key, 4)
    bound = 1.0 / jnp.sqrt(jnp.float32(input_size))
    w1 = jax.random.uniform(k1, (input_size, input_size), jnp.float32, -bound, bound)
    b1 = jax.random.uniform(k2, (input_size,), jnp.float32, -bound, bound)
    w2 = jax.random.uniform(k3, (1, input_size), jnp.float32, -bound, bound)
    b2 = jax.random.uniform(k4, (1,), jnp.float32, -bound, bound)
    # kernel layouts: w1 transposed (in, out); w2 kept as a lane-dense (1, D) row.
    return w1.T, b1.reshape(1, input_size), w2, b2.reshape(1, 1)


def reference_forward(x, w1_t, b1, w2_row, b2):
    h = jnp.dot(x, w1_t, precision=jax.lax.Precision.HIGHEST) + b1
    feat = jnp.where(h >= 0, h, 0.01 * h)
    logit = jnp.dot(feat, w2_row.T, precision=jax.lax.Precision.HIGHEST) + b2
    return feat, jax.nn.sigmoid(logit)


if __name__ == "__main__":
    key = jax.random.PRNGKey(0)
    k_x, k_p = jax.random.split(key)

    # batch not a multiple of the tile on purpose to exercise the padding path;
    # big enough to fill MXU rows / vregs so the grid actually pipelines.
    batch, input_size = 200, 128
    x = jax.random.normal(k_x, (batch, input_size), dtype=jnp.float32)
    w1_t, b1, w2_row, b2 = init_params(k_p, input_size)

    feat, out = discriminator_forward(x, w1_t, b1, w2_row, b2)
    jax.block_until_ready((feat, out))

    feat_ref, out_ref = reference_forward(x, w1_t, b1, w2_row, b2)
    assert feat.shape == (batch, input_size) and out.shape == (batch, 1)
    assert jnp.allclose(feat, feat_ref, atol=2e-5, rtol=2e-5)
    assert jnp.allclose(out, out_ref, atol=2e-5, rtol=2e-5)

    print("KERNEL_OK")
</pallas_src>

<mosaic_0001>
module attributes {stable_mosaic.version = 11 : i64} {
  func.func @_discriminator_kernel(%arg0: i32, %arg1: i32, %arg2: memref<128x128xf32, #tpu.memory_space<vmem>>, %arg3: memref<128x128xf32, #tpu.memory_space<vmem>>, %arg4: memref<1x128xf32, #tpu.memory_space<vmem>>, %arg5: memref<1x128xf32, #tpu.memory_space<vmem>>, %arg6: memref<1x1xf32, #tpu.memory_space<smem>>, %arg7: memref<128x128xf32, #tpu.memory_space<vmem>>, %arg8: memref<128x1xf32, #tpu.memory_space<vmem>>, %arg9: memref<128x128xf32, #tpu.memory_space<vmem>>) attributes {dimension_semantics = [#tpu.dimension_semantics<parallel>, #tpu.dimension_semantics<arbitrary>], iteration_bounds = array<i64: 2, 1>, scalar_prefetch = 0 : i64, scratch_operands = 1 : i64, tpu.core_type = #tpu.core_type<tc>, window_params = [{transform_indices = @transform_0, window_bounds = array<i64: 128, 128>}, {transform_indices = @transform_1, window_bounds = array<i64: 128, 128>}, {pipeline_mode = #tpu.pipeline_mode<synchronous>, transform_indices = @transform_2, window_bounds = array<i64: 1, 128>}, {pipeline_mode = #tpu.pipeline_mode<synchronous>, transform_indices = @transform_3, window_bounds = array<i64: 1, 128>}, {transform_indices = @transform_4, window_bounds = array<i64: 1, 1>}, {transform_indices = @transform_5, window_bounds = array<i64: 128, 128>}, {transform_indices = @transform_6, window_bounds = array<i64: 128, 1>}]} {
    %c0_i32 = arith.constant 0 : i32
    %0 = arith.cmpi eq, %arg1, %c0_i32 : i32
    %1 = arith.extui %0 : i1 to i32
    %c0_i32_0 = arith.constant 0 : i32
    %2 = arith.cmpi ne, %1, %c0_i32_0 : i32
    scf.if %2 {
      %cst_10 = arith.constant 0.000000e+00 : f32
      %12 = vector.broadcast %cst_10 : f32 to vector<128x128xf32>
      %c0_11 = arith.constant 0 : index
      %c0_12 = arith.constant 0 : index
      %13 = vector.load %arg9[%c0_11, %c0_12] : memref<128x128xf32, #tpu.memory_space<vmem>>, vector<128x128xf32>
      tpu.vector_store %arg9[%c0_11, %c0_12], %12 {strides = array<i32>} : memref<128x128xf32, #tpu.memory_space<vmem>>, vector<128x128xf32>,
    } else {
    }
    %c0 = arith.constant 0 : index
    %c0_1 = arith.constant 0 : index
    %3 = vector.load %arg9[%c0, %c0_1] : memref<128x128xf32, #tpu.memory_space<vmem>>, vector<128x128xf32>
    %c0_2 = arith.constant 0 : index
    %c0_3 = arith.constant 0 : index
    %4 = vector.load %arg2[%c0_2, %c0_3] : memref<128x128xf32, #tpu.memory_space<vmem>>, vector<128x128xf32>
    %c0_4 = arith.constant 0 : index
    %c0_5 = arith.constant 0 : index
    %5 = vector.load %arg3[%c0_4, %c0_5] : memref<128x128xf32, #tpu.memory_space<vmem>>, vector<128x128xf32>
    %cst = arith.constant dense<0.000000e+00> : vector<128x128xf32>
    %6 = tpu.matmul %4, %5, %cst {dimension_numbers = #tpu.dot_dimension_numbers<[1], [0], [0], [1], [0, 0, 1, 1], [], []>} : vector<128x128xf32>, vector<128x128xf32>, vector<128x128xf32> -> vector<128x128xf32>
    %7 = arith.addf %3, %6 : vector<128x128xf32>
    %c0_6 = arith.constant 0 : index
    %c0_7 = arith.constant 0 : index
    %8 = vector.load %arg9[%c0_6, %c0_7] : memref<128x128xf32, #tpu.memory_space<vmem>>, vector<128x128xf32>
    tpu.vector_store %arg9[%c0_6, %c0_7], %7 {strides = array<i32>} : memref<128x128xf32, #tpu.memory_space<vmem>>, vector<128x128xf32>,
    %c0_i32_8 = arith.constant 0 : i32
    %9 = arith.cmpi eq, %arg1, %c0_i32_8 : i32
    %10 = arith.extui %9 : i1 to i32
    %c0_i32_9 = arith.constant 0 : i32
    %11 = arith.cmpi ne, %10, %c0_i32_9 : i32
    scf.if %11 {
      %c0_10 = arith.constant 0 : index
      %c0_11 = arith.constant 0 : index
      %12 = vector.load %arg9[%c0_10, %c0_11] : memref<128x128xf32, #tpu.memory_space<vmem>>, vector<128x128xf32>
      %c0_12 = arith.constant 0 : index
      %c0_13 = arith.constant 0 : index
      %13 = vector.load %arg4[%c0_12, %c0_13] : memref<1x128xf32, #tpu.memory_space<vmem>>, vector<1x128xf32>
      %14 = vector.broadcast %13 : vector<1x128xf32> to vector<128x128xf32>
      %15 = arith.addf %12, %14 : vector<128x128xf32>
      %cst_14 = arith.constant 0.000000e+00 : f32
      %16 = vector.broadcast %cst_14 : f32 to vector<128x128xf32>
      %17 = arith.cmpf oge, %15, %16 : vector<128x128xf32>
      %cst_15 = arith.constant 0.00999999977 : f32
      %18 = vector.broadcast %cst_15 : f32 to vector<128x128xf32>
      %19 = arith.mulf %18, %15 : vector<128x128xf32>
      %20 = arith.select %17, %15, %19 : vector<128x128xi1>, vector<128x128xf32>
      %c0_16 = arith.constant 0 : index
      %c0_17 = arith.constant 0 : index
      %21 = vector.load %arg7[%c0_16, %c0_17] : memref<128x128xf32, #tpu.memory_space<vmem>>, vector<128x128xf32>
      tpu.vector_store %arg7[%c0_16, %c0_17], %20 {strides = array<i32>} : memref<128x128xf32, #tpu.memory_space<vmem>>, vector<128x128xf32>,
      %c0_18 = arith.constant 0 : index
      %c0_19 = arith.constant 0 : index
      %22 = vector.load %arg5[%c0_18, %c0_19] : memref<1x128xf32, #tpu.memory_space<vmem>>, vector<1x128xf32>
      %23 = vector.broadcast %22 : vector<1x128xf32> to vector<128x128xf32>
      %24 = arith.mulf %20, %23 : vector<128x128xf32>
      %cst_20 = arith.constant dense<0.000000e+00> : vector<128xf32>
      %25 = vector.multi_reduction <add>, %24, %cst_20 [1] : vector<128x128xf32> to vector<128xf32>
      %26 = vector.shape_cast %25 : vector<128xf32> to vector<128x1xf32>
      %c0_21 = arith.constant 0 : index
      %c0_22 = arith.constant 0 : index
      %27 = memref.load %arg6[%c0_21, %c0_22] : memref<1x1xf32, #tpu.memory_space<smem>>
      %28 = vector.broadcast %27 : f32 to vector<128x1xf32>
      %29 = arith.addf %26, %28 : vector<128x1xf32>
      %30 = arith.negf %29 : vector<128x1xf32>
      %31 = math.exp %30 : vector<128x1xf32>
      %cst_23 = arith.constant 1.000000e+00 : f32
      %32 = vector.broadcast %cst_23 : f32 to vector<128x1xf32>
      %33 = arith.addf %32, %31 : vector<128x1xf32>
      %34 = arith.divf %32, %33 : vector<128x1xf32>
      %c0_24 = arith.constant 0 : index
      %c0_25 = arith.constant 0 : index
      %35 = vector.load %arg8[%c0_24, %c0_25] : memref<128x1xf32, #tpu.memory_space<vmem>>, vector<128x1xf32>
      tpu.vector_store %arg8[%c0_24, %c0_25], %34 {strides = array<i32>} : memref<128x1xf32, #tpu.memory_space<vmem>>, vector<128x1xf32>,
    } else {
    }
    return
  }
  func.func @transform_0(%arg0: i32, %arg1: i32) -> (i32, i32) {
    %c0_i32 = arith.constant 0 : i32
    return %arg0, %arg1 : i32, i32
  }
  func.func @transform_1(%arg0: i32, %arg1: i32) -> (i32, i32) {
    %c0_i32 = arith.constant 0 : i32
    %c0_i32_0 = arith.constant 0 : i32
    return %arg1, %c0_i32 : i32, i32
  }
  func.func @transform_2(%arg0: i32, %arg1: i32) -> (i32, i32) {
    %c0_i32 = arith.constant 0 : i32
    %c0_i32_0 = arith.constant 0 : i32
    %c0_i32_1 = arith.constant 0 : i32
    return %c0_i32, %c0_i32_0 : i32, i32
  }
  func.func @transform_3(%arg0: i32, %arg1: i32) -> (i32, i32) {
    %c0_i32 = arith.constant 0 : i32
    %c0_i32_0 = arith.constant 0 : i32
    %c0_i32_1 = arith.constant 0 : i32
    return %c0_i32, %c0_i32_0 : i32, i32
  }
  func.func @transform_4(%arg0: i32, %arg1: i32) -> (i32, i32) {
    %c0_i32 = arith.constant 0 : i32
    %c0_i32_0 = arith.constant 0 : i32
    %c0_i32_1 = arith.constant 0 : i32
    return %c0_i32, %c0_i32_0 : i32, i32
  }
  func.func @transform_5(%arg0: i32, %arg1: i32) -> (i32, i32) {
    %c0_i32 = arith.constant 0 : i32
    %c0_i32_0 = arith.constant 0 : i32
    return %arg0, %c0_i32 : i32, i32
  }
  func.func @transform_6(%arg0: i32, %arg1: i32) -> (i32, i32) {
    %c0_i32 = arith.constant 0 : i32
    %c0_i32_0 = arith.constant 0 : i32
    return %arg0, %c0_i32 : i32, i32
  }
}

</mosaic_0001>

<llo_original>
// kernel: tpu_custom_call.1
$region0: #{tpu_custom_call.1}
  #allocation0 [shape = 'u32[]', space=smem, size = 0x4, offset = 0x4, fixed_abs, tag = 'smem constant byte address 0x4 - core index']
  #allocation1 [shape = 'u32[144,128]{1,0:T(1,128)}', space=vmem, size = 0x12000, scoped, tag = 'internal scratch']
  #allocation2 [shape = 'f32[128,128]{1,0:T(8,128)}', space=vmem, size = 0x10000, scoped, tag = 'scratch operand']
  #allocation3 [shape = 'f32[1,1]{1,0:T(1,128)S(6)}', space=smem, size = 0x200, scoped, tag = 'scoped memory for tpu_custom_call.1']
  %s0 = inlined_call_operand.hbm [shape: f32[256,128], index: 0, kind: input, shape index: {}]
  %s1 = inlined_call_operand.hbm [shape: f32[128,128], index: 1, kind: input, shape index: {}]
  %s2 = inlined_call_operand.vmem [shape: f32[1,128], index: 2, kind: input, shape index: {}]
  %s3 = inlined_call_operand.vmem [shape: f32[1,128], index: 3, kind: input, shape index: {}]
  %s4 = inlined_call_operand.<no memory space> [shape: f32[1,1], index: 4, kind: input, shape index: {}]
  %s5 = inlined_call_operand.hbm [shape: f32[256,128], index: 5, kind: output, shape index: {0}]
  %s6 = inlined_call_operand.vmem [shape: f32[256,1], index: 6, kind: output, shape index: {1}]
  %7 = xla_tuple %s5, %s6
  %s8 = sld [smem:[#allocation0]]
  $region77: #{tpu_custom_call.1} parent=0
    _
  %s10 = ssub.s32 1, %s8
  %s11 = scalar_select 0, %s10, %s8
  %12 = sst [smem:[#allocation3]] %s4
  $region1: #{tpu_custom_call.1} parent=0
    #allocation4 [shape = 'u8[131072]{0}', space=vmem, size = 0x20000, scoped, tag = 'input window, operand 0']
    #allocation5 [shape = 's32[2]{0}', space=sflag, size = 0x8, scoped, tag = 'scoped memory for tpu_custom_call.1']
    #allocation6 [shape = 's32[2]{0}', space=sflag, size = 0x8, scoped, tag = 'scoped memory for tpu_custom_call.1']
    #allocation7 [shape = 'u8[65536]{0}', space=vmem, size = 0x10000, scoped, tag = 'input window, operand 1, single buffered']
    #allocation8 [shape = 's32[1]{0}', space=sflag, size = 0x4, scoped, tag = 'scoped memory for tpu_custom_call.1']
    #allocation9 [shape = 'u8[131072]{0}', space=vmem, size = 0x20000, scoped, tag = 'output window, operand 0']
    %13 = vsyncpa [#allocation5], 0
    %s14 = scalar_lea.sflag [#allocation5], 1
    %15 = vsyncpa %s14, 0
    %16 = vsyncpa [#allocation8], 0
    %17 = vsyncpa [#allocation6], 0
    %s18 = scalar_lea.sflag [#allocation6], 1
    %19 = vsyncpa %s18, 0
    loop: start=0, step=1, limit=4
    $region2: #{tpu_custom_call.1} parent=1 // loop_pre_header
      _
    $region3: #{tpu_custom_call.1} parent=1 // loop_header
      %s21 = sphi 0, %s25
      %p22 = scmp.ge.s32.totalorder %s21, 4
      %s28 = sphi 0, %s40
      %s29 = sphi 0, %s36
      %s30 = sphi 0, %s28
      %s31 = sphi 0, %s29
      %s32 = sphi 0, %s30
      %s33 = sphi 0, %s31
      %s45 = sphi 0, %s47
      %s48 = sphi 0, %s45
      %s49 = sphi 0, %s48
      %s65 = sphi 0, %s49
      %s71 = sphi 0, %s73
      %s74 = sphi 0, %s71
      %s75 = sphi 0, %s74
      %s91 = sphi 0, %s75
      %s95 = sphi 0, %s95
      %s97 = sphi 0, %s95
      %s98 = sphi 0, %s97
      %s112 = sphi 0, %s98
      %s116 = sphi 0, %s116
      %s118 = sphi 0, %s116
      %s119 = sphi 0, %s118
      %s133 = sphi 0, %s119
      %s137 = sphi 0, %s137
      %s139 = sphi 0, %s137
      %s140 = sphi 0, %s139
      %s154 = sphi 0, %s140
      %s160 = sphi 0, %s162
      %s163 = sphi 0, %s160
      %s164 = sphi 0, %s163
      %s180 = sphi 0, %s164
      %s186 = sphi 0, %s188
      %s189 = sphi 0, %s186
      %s190 = sphi 0, %s189
      %s206 = sphi 0, %s190
    $region4: #{tpu_custom_call.1} parent=1 // loop_header_branch
      %24 = sbr.rel (%p22) target = $region8
    $region5: #{tpu_custom_call.1} parent=1 // loop_body
      %s26 = ssub.s32 %s21, 1
      %s27 = ssub.s32 %s21, 2
      %s34 = sadd.s32 1, %s29
      %p35 = scmp.ge.s32.totalorder %s34, 1
      %s36 = scalar_select %p35, 0, %s34
      %s37 = sadd.s32 1, %s28
      %s38 = scalar_select %p35, %s37, %s28
      %p39 = scmp.ge.s32.totalorder %s38, 2
      %s40 = scalar_select %p39, 0, %s38
      %s41 = ssub.s32 %s28, %s40
      %s42 = ssub.s32 %s29, %s36
      %s43 = sor.u32 %s41, %s42
      %p44 = scmp.eq.s32.totalorder %s43, 0
      %s46 = sadd.s32 %s45, 1
      %s47 = scalar_select %p44, %s45, %s46
      %p50 = pneg %p44
      %p51 = scmp.eq.s32.totalorder %s21, 1
      %p52 = por %p50, %p51
      %p53 = scmp.ne.s32.totalorder %s45, %s48
      %p54 = scmp.eq.s32.totalorder %s21, 0
      %p55 = por %p53, %p54
      %p56 = scmp.ne.s32.totalorder %s45, %s48
      %p57 = scmp.eq.s32.totalorder %s26, 1
      %p58 = por %p56, %p57
      %p59 = scmp.ne.s32.totalorder %s48, %s49
      %p60 = scmp.eq.s32.totalorder %s26, 0
      %p61 = por %p59, %p60
      %p62 = scmp.ne.s32.totalorder %s48, %s49
      %p63 = scmp.eq.s32.totalorder %s27, 1
      %p64 = por %p62, %p63
      %p66 = scmp.ne.s32.totalorder %s49, %s65
      %p67 = scmp.eq.s32.totalorder %s27, 0
      %p68 = por %p66, %p67
      %s69 = ssub.s32 %s29, %s36
      %p70 = scmp.eq.s32.totalorder %s69, 0
      %s72 = sadd.s32 %s71, 1
      %s73 = scalar_select %p70, %s71, %s72
      %p76 = pneg %p70
      %p77 = scmp.eq.s32.totalorder %s21, 1
      %p78 = por %p76, %p77
      %p79 = scmp.ne.s32.totalorder %s71, %s74
      %p80 = scmp.eq.s32.totalorder %s21, 0
      %p81 = por %p79, %p80
      %p82 = scmp.ne.s32.totalorder %s71, %s74
      %p83 = scmp.eq.s32.totalorder %s26, 1
      %p84 = por %p82, %p83
      %p85 = scmp.ne.s32.totalorder %s74, %s75
      %p86 = scmp.eq.s32.totalorder %s26, 0
      %p87 = por %p85, %p86
      %p88 = scmp.ne.s32.totalorder %s74, %s75
      %p89 = scmp.eq.s32.totalorder %s27, 1
      %p90 = por %p88, %p89
      %p92 = scmp.ne.s32.totalorder %s75, %s91
      %p93 = scmp.eq.s32.totalorder %s27, 0
      %p94 = por %p92, %p93
      %s96 = sadd.s32 %s95, 1
      %p99 = scmp.eq.s32.totalorder %s21, 1
      %p100 = scmp.ne.s32.totalorder %s95, %s97
      %p101 = scmp.eq.s32.totalorder %s21, 0
      %p102 = por %p100, %p101
      %p103 = scmp.ne.s32.totalorder %s95, %s97
      %p104 = scmp.eq.s32.totalorder %s26, 1
      %p105 = por %p103, %p104
      %p106 = scmp.ne.s32.totalorder %s97, %s98
      %p107 = scmp.eq.s32.totalorder %s26, 0
      %p108 = por %p106, %p107
      %p109 = scmp.ne.s32.totalorder %s97, %s98
      %p110 = scmp.eq.s32.totalorder %s27, 1
      %p111 = por %p109, %p110
      %p113 = scmp.ne.s32.totalorder %s98, %s112
      %p114 = scmp.eq.s32.totalorder %s27, 0
      %p115 = por %p113, %p114
      %s117 = sadd.s32 %s116, 1
      %p120 = scmp.eq.s32.totalorder %s21, 1
      %p121 = scmp.ne.s32.totalorder %s116, %s118
      %p122 = scmp.eq.s32.totalorder %s21, 0
      %p123 = por %p121, %p122
      %p124 = scmp.ne.s32.totalorder %s116, %s118
      %p125 = scmp.eq.s32.totalorder %s26, 1
      %p126 = por %p124, %p125
      %p127 = scmp.ne.s32.totalorder %s118, %s119
      %p128 = scmp.eq.s32.totalorder %s26, 0
      %p129 = por %p127, %p128
      %p130 = scmp.ne.s32.totalorder %s118, %s119
      %p131 = scmp.eq.s32.totalorder %s27, 1
      %p132 = por %p130, %p131
      %p134 = scmp.ne.s32.totalorder %s119, %s133
      %p135 = scmp.eq.s32.totalorder %s27, 0
      %p136 = por %p134, %p135
      %s138 = sadd.s32 %s137, 1
      %p141 = scmp.eq.s32.totalorder %s21, 1
      %p142 = scmp.ne.s32.totalorder %s137, %s139
      %p143 = scmp.eq.s32.totalorder %s21, 0
      %p144 = por %p142, %p143
      %p145 = scmp.ne.s32.totalorder %s137, %s139
      %p146 = scmp.eq.s32.totalorder %s26, 1
      %p147 = por %p145, %p146
      %p148 = scmp.ne.s32.totalorder %s139, %s140
      %p149 = scmp.eq.s32.totalorder %s26, 0
      %p150 = por %p148, %p149
      %p151 = scmp.ne.s32.totalorder %s139, %s140
      %p152 = scmp.eq.s32.totalorder %s27, 1
      %p153 = por %p151, %p152
      %p155 = scmp.ne.s32.totalorder %s140, %s154
      %p156 = scmp.eq.s32.totalorder %s27, 0
      %p157 = por %p155, %p156
      %s158 = ssub.s32 %s28, %s40
      %p159 = scmp.eq.s32.totalorder %s158, 0
      %s161 = sadd.s32 %s160, 1
      %s162 = scalar_select %p159, %s160, %s161
      %p165 = pneg %p159
      %p166 = scmp.eq.s32.totalorder %s21, 1
      %p167 = por %p165, %p166
      %p168 = scmp.ne.s32.totalorder %s160, %s163
      %p169 = scmp.eq.s32.totalorder %s21, 0
      %p170 = por %p168, %p169
      %p171 = scmp.ne.s32.totalorder %s160, %s163
      %p172 = scmp.eq.s32.totalorder %s26, 1
      %p173 = por %p171, %p172
      %p174 = scmp.ne.s32.totalorder %s163, %s164
      %p175 = scmp.eq.s32.totalorder %s26, 0
      %p176 = por %p174, %p175
      %p177 = scmp.ne.s32.totalorder %s163, %s164
      %p178 = scmp.eq.s32.totalorder %s27, 1
      %p179 = por %p177, %p178
      %p181 = scmp.ne.s32.totalorder %s164, %s180
      %p182 = scmp.eq.s32.totalorder %s27, 0
      %p183 = por %p181, %p182
      %s184 = ssub.s32 %s28, %s40
      %p185 = scmp.eq.s32.totalorder %s184, 0
      %s187 = sadd.s32 %s186, 1
      %s188 = scalar_select %p185, %s186, %s187
      %p191 = pneg %p185
      %p192 = scmp.eq.s32.totalorder %s21, 1
      %p193 = por %p191, %p192
      %p194 = scmp.ne.s32.totalorder %s186, %s189
      %p195 = scmp.eq.s32.totalorder %s21, 0
      %p196 = por %p194, %p195
      %p197 = scmp.ne.s32.totalorder %s186, %s189
      %p198 = scmp.eq.s32.totalorder %s26, 1
      %p199 = por %p197, %p198
      %p200 = scmp.ne.s32.totalorder %s189, %s190
      %p201 = scmp.eq.s32.totalorder %s26, 0
      %p202 = por %p200, %p201
      %p203 = scmp.ne.s32.totalorder %s189, %s190
      %p204 = scmp.eq.s32.totalorder %s27, 1
      %p205 = por %p203, %p204
      %p207 = scmp.ne.s32.totalorder %s190, %s206
      %p208 = scmp.eq.s32.totalorder %s27, 0
      %p209 = por %p207, %p208
      %p210 = scmp.le.s32.totalorder 1, %s21
      %p211 = scmp.lt.s32.totalorder %s21, 3
      %p212 = pnand %p210, %p211
      %p213 = pneg %p212
      // Predicated region
      $region9: #{tpu_custom_call.1} parent=5 // pred_check
        _
      $region10: #{tpu_custom_call.1} parent=5 // pred_check_branch
        %215 = sbr.rel (%p212) target = $region12
      $region11: #{tpu_custom_call.1} parent=5 // pred_region
        %s216 = ssub.s32 %s21, 1
        // Predicated region
        $region13: #{tpu_custom_call.1} parent=11 // pred_check
          %p217 = pneg %p87
        $region14: #{tpu_custom_call.1} parent=11 // pred_check_branch
          %219 = sbr.rel (%p217) target = $region16
        $region15: #{tpu_custom_call.1} parent=11 // pred_region
          %s220 = smul.u32 16, %s31
          %s222 = ssub.s32 2048, 2048
          %223 = vsyncadd [#allocation8], %s222
          %s224 = smul.addr %s220, 128
          %s225 = scalar_lea.hbm %s1, %s224
          %s226 = sshll.u32 [#allocation7], 4
          %s227 = int_to_ptr.vmem [resolvable:$true] %s226
          %232 = dma.hbm_to_vmem [thread:$0]  %s225, 2048, %s227, [#allocation8], 128, 128, 8
        $region16: #{tpu_custom_call.1} parent=11 // pred_fallthru
          _
        // Predicated region
        $region17: #{tpu_custom_call.1} parent=11 // pred_check
          %p233 = pneg %p108
        $region18: #{tpu_custom_call.1} parent=11 // pred_check_branch
          %235 = sbr.rel (%p233) target = $region20
        $region19: #{tpu_custom_call.1} parent=11 // pred_region
          _
        $region20: #{tpu_custom_call.1} parent=11 // pred_fallthru
          _
        // Predicated region
        $region21: #{tpu_custom_call.1} parent=11 // pred_check
          %p236 = pneg %p129
        $region22: #{tpu_custom_call.1} parent=11 // pred_check_branch
          %238 = sbr.rel (%p236) target = $region24
        $region23: #{tpu_custom_call.1} parent=11 // pred_region
          _
        $region24: #{tpu_custom_call.1} parent=11 // pred_fallthru
          _
        // Predicated region
        $region25: #{tpu_custom_call.1} parent=11 // pred_check
          %p239 = pneg %p150
        $region26: #{tpu_custom_call.1} parent=11 // pred_check_branch
          %241 = sbr.rel (%p239) target = $region28
        $region27: #{tpu_custom_call.1} parent=11 // pred_region
          _
        $region28: #{tpu_custom_call.1} parent=11 // pred_fallthru
          _
      $region12: #{tpu_custom_call.1} parent=5 // pred_fallthru
        _
      %p242 = scmp.lt.s32.totalorder %s21, 2
      // Predicated region
      $region29: #{tpu_custom_call.1} parent=5 // pred_check
        %p243 = pneg %p242
      $region30: #{tpu_custom_call.1} parent=5 // pred_check_branch
        %245 = sbr.rel (%p243) target = $region32
      $region31: #{tpu_custom_call.1} parent=5 // pred_region
        // Predicated region
        $region33: #{tpu_custom_call.1} parent=31 // pred_check
          %p246 = pneg %p55
        $region34: #{tpu_custom_call.1} parent=31 // pred_check_branch
          %248 = sbr.rel (%p246) target = $region36
        $region35: #{tpu_custom_call.1} parent=31 // pred_region
          %s249 = sand.u32 %s45, 1
          %s250 = scalar_lea.sflag [#allocation5], %s249
          %s251 = sand.u32 %s45, 1
          %s252 = smul.addr %s251, 128
          %s253 = scalar_lea.vmem [#allocation4], %s252
          %s254 = smul.u32 16, %s28
          %s256 = ssub.s32 2048, 2048
          %257 = vsyncadd %s250, %s256
          %s258 = sadd.s32 %s29, %s254
          %s259 = smul.addr %s258, 128
          %s260 = scalar_lea.hbm %s0, %s259
          %s261 = sshll.u32 %s253, 4
          %s262 = int_to_ptr.vmem [resolvable:$true] %s261
          %267 = dma.hbm_to_vmem [thread:$0]  %s260, 2048, %s262, %s250, 128, 128, 8
        $region36: #{tpu_custom_call.1} parent=31 // pred_fallthru
          _
      $region32: #{tpu_custom_call.1} parent=5 // pred_fallthru
        _
      %p268 = scmp.le.s32.totalorder 1, %s21
      %p269 = scmp.lt.s32.totalorder %s21, 3
      %p270 = pnand %p268, %p269
      %p271 = pneg %p270
      // Predicated region
      $region37: #{tpu_custom_call.1} parent=5 // pred_check
        _
      $region38: #{tpu_custom_call.1} parent=5 // pred_check_branch
        %273 = sbr.rel (%p270) target = $region40
      $region39: #{tpu_custom_call.1} parent=5 // pred_region
        %s274 = ssub.s32 %s21, 1
        %s275 = sand.u32 %s48, 1
        %s276 = scalar_lea.sflag [#allocation5], %s275
        %s277 = sand.u32 %s48, 1
        %s278 = smul.addr %s277, 128
        %s279 = scalar_lea.vmem [#allocation4], %s278
        // Predicated region
        $region41: #{tpu_custom_call.1} parent=39 // pred_check
          %p280 = pneg %p61
        $region42: #{tpu_custom_call.1} parent=39 // pred_check_branch
          %282 = sbr.rel (%p280) target = $region44
        $region43: #{tpu_custom_call.1} parent=39 // pred_region
          %283 = dma.done %s276, 2048
        $region44: #{tpu_custom_call.1} parent=39 // pred_fallthru
          _
        // Predicated region
        $region45: #{tpu_custom_call.1} parent=39 // pred_check
          %p284 = pneg %p87
        $region46: #{tpu_custom_call.1} parent=39 // pred_check_branch
          %286 = sbr.rel (%p284) target = $region48
        $region47: #{tpu_custom_call.1} parent=39 // pred_region
          %287 = dma.done [#allocation8], 2048
        $region48: #{tpu_custom_call.1} parent=39 // pred_fallthru
          _
        %s288 = sand.u32 %s48, 1
        %s289 = scalar_lea.sflag [#allocation5], %s288
        %s290 = sand.u32 %s48, 1
        %s291 = smul.addr %s290, 128
        %s292 = scalar_lea.vmem [#allocation4], %s291
        %p293 = pneg %p61
        %p294 = pneg %p58
        %p295 = pneg %p87
        %p296 = pneg %p84
        %p297 = pneg %p108
        %p298 = pneg %p105
        %p299 = pneg %p129
        %p300 = pneg %p126
        %p301 = pneg %p150
        %p302 = pneg %p147
        %p303 = pneg %p176
        %p304 = pneg %p173
        %s305 = sand.u32 %s163, 1
        %s306 = scalar_lea.sflag [#allocation6], %s305
        %s307 = sand.u32 %s163, 1
        %s308 = smul.addr %s307, 128
        %s309 = scalar_lea.vmem [#allocation9], %s308
        %p310 = pneg %p202
        %p311 = pneg %p199
        %s312 = smul.u32 16, %s30
        %p313 = scmp.lt.s32.totalorder %s312, 31
        %s314 = scalar_select %p313, %s312, 31
        %s315 = smul.addr %s314, 8
        %s316 = scalar_lea.vmem %s6, %s315
        %s317 = smul.u32 16, %s30
        %s318 = smul.u32 16, %s31
        %s319 = smul.u32 16, %s30
        %s320 = smul.u32 16, %s30
        %p321 = scmp.lt.s32.totalorder %s320, 31
        %s322 = scalar_select %p321, %s320, 31
        %s323 = smul.addr %s322, 8
        %s324 = scalar_lea.vmem %s6, %s323
        %s325 = smul.u32 16, %s30
        %p326 = scmp.eq.s32.totalorder %s31, 0
        // Predicated region
        $region49: #{tpu_custom_call.1} parent=39 // pred_check
          %p327 = pneg %p326
        $region50: #{tpu_custom_call.1} parent=39 // pred_check_branch
          %329 = sbr.rel (%p327) target = $region52
        $region51: #{tpu_custom_call.1} parent=39 // pred_region
          %330 = vst [vmem:[#allocation2] sm:$0xff] 0.0
          %331 = vst [vmem:[#allocation2 + $0x8] sm:$0xff] 0.0
          %332 = vst [vmem:[#allocation2 + $0x10] sm:$0xff] 0.0
          %333 = vst [vmem:[#allocation2 + $0x18] sm:$0xff] 0.0
          %334 = vst [vmem:[#allocation2 + $0x20] sm:$0xff] 0.0
          %335 = vst [vmem:[#allocation2 + $0x28] sm:$0xff] 0.0
          %336 = vst [vmem:[#allocation2 + $0x30] sm:$0xff] 0.0
          %337 = vst [vmem:[#allocation2 + $0x38] sm:$0xff] 0.0
          %338 = vst [vmem:[#allocation2 + $0x40] sm:$0xff] 0.0
          %339 = vst [vmem:[#allocation2 + $0x48] sm:$0xff] 0.0
          %340 = vst [vmem:[#allocation2 + $0x50] sm:$0xff] 0.0
          %341 = vst [vmem:[#allocation2 + $0x58] sm:$0xff] 0.0
          %342 = vst [vmem:[#allocation2 + $0x60] sm:$0xff] 0.0
          %343 = vst [vmem:[#allocation2 + $0x68] sm:$0xff] 0.0
          %344 = vst [vmem:[#allocation2 + $0x70] sm:$0xff] 0.0
          %345 = vst [vmem:[#allocation2 + $0x78] sm:$0xff] 0.0
        $region52: #{tpu_custom_call.1} parent=39 // pred_fallthru
          _
        %v346 = vld [vmem:[#allocation2] sm:$0xff]
        %v347 = vld [vmem:[#allocation2 + $0x8] sm:$0xff]
        %v348 = vld [vmem:[#allocation2 + $0x10] sm:$0xff]
        %v349 = vld [vmem:[#allocation2 + $0x18] sm:$0xff]
        %v350 = vld [vmem:[#allocation2 + $0x20] sm:$0xff]
        %v351 = vld [vmem:[#allocation2 + $0x28] sm:$0xff]
        %v352 = vld [vmem:[#allocation2 + $0x30] sm:$0xff]
        %v353 = vld [vmem:[#allocation2 + $0x38] sm:$0xff]
        %v354 = vld [vmem:[#allocation2 + $0x40] sm:$0xff]
        %v355 = vld [vmem:[#allocation2 + $0x48] sm:$0xff]
        %v356 = vld [vmem:[#allocation2 + $0x50] sm:$0xff]
        %v357 = vld [vmem:[#allocation2 + $0x58] sm:$0xff]
        %v358 = vld [vmem:[#allocation2 + $0x60] sm:$0xff]
        %v359 = vld [vmem:[#allocation2 + $0x68] sm:$0xff]
        %v360 = vld [vmem:[#allocation2 + $0x70] sm:$0xff]
        %v361 = vld [vmem:[#allocation2 + $0x78] sm:$0xff]
        %v362 = vld [vmem:[%s279] sm:$0xff]
        %v363 = vld [vmem:[%s279 + $0x8] sm:$0xff]
        %v364 = vld [vmem:[%s279 + $0x10] sm:$0xff]
        %v365 = vld [vmem:[%s279 + $0x18] sm:$0xff]
        %v366 = vld [vmem:[%s279 + $0x20] sm:$0xff]
        %v367 = vld [vmem:[%s279 + $0x28] sm:$0xff]
        %v368 = vld [vmem:[%s279 + $0x30] sm:$0xff]
        %v369 = vld [vmem:[%s279 + $0x38] sm:$0xff]
        %v370 = vld [vmem:[%s279 + $0x40] sm:$0xff]
        %v371 = vld [vmem:[%s279 + $0x48] sm:$0xff]
        %v372 = vld [vmem:[%s279 + $0x50] sm:$0xff]
        %v373 = vld [vmem:[%s279 + $0x58] sm:$0xff]
        %v374 = vld [vmem:[%s279 + $0x60] sm:$0xff]
        %v375 = vld [vmem:[%s279 + $0x68] sm:$0xff]
        %v376 = vld [vmem:[%s279 + $0x70] sm:$0xff]
        %v377 = vld [vmem:[%s279 + $0x78] sm:$0xff]
        %v378 = vld [vmem:[#allocation7] sm:$0xff]
        %v379 = vld [vmem:[#allocation7 + $0x8] sm:$0xff]
        %v380 = vld [vmem:[#allocation7 + $0x10] sm:$0xff]
        %v381 = vld [vmem:[#allocation7 + $0x18] sm:$0xff]
        %v382 = vld [vmem:[#allocation7 + $0x20] sm:$0xff]
        %v383 = vld [vmem:[#allocation7 + $0x28] sm:$0xff]
        %v384 = vld [vmem:[#allocation7 + $0x30] sm:$0xff]
        %v385 = vld [vmem:[#allocation7 + $0x38] sm:$0xff]
        %v386 = vld [vmem:[#allocation7 + $0x40] sm:$0xff]
        %v387 = vld [vmem:[#allocation7 + $0x48] sm:$0xff]
        %v388 = vld [vmem:[#allocation7 + $0x50] sm:$0xff]
        %v389 = vld [vmem:[#allocation7 + $0x58] sm:$0xff]
        %v390 = vld [vmem:[#allocation7 + $0x60] sm:$0xff]
        %v391 = vld [vmem:[#allocation7 + $0x68] sm:$0xff]
        %v392 = vld [vmem:[#allocation7 + $0x70] sm:$0xff]
        %v393 = vld [vmem:[#allocation7 + $0x78] sm:$0xff]
        %394 = vmatprep.subr.mxu0 0.0
        %395 = vmatpush1.msra.mxu0 %v378
        %396 = vmatprep.subr.mxu0 0.0
        %397 = vmatpush1.msra.mxu0 %v379
        %398 = vmatprep.subr.mxu0 0.0
        %399 = vmatpush1.msra.mxu0 %v380
        %400 = vmatprep.subr.mxu0 0.0
        %401 = vmatpush1.msra.mxu0 %v381
        %402 = vmatprep.subr.mxu0 0.0
        %403 = vmatpush1.msra.mxu0 %v382
        %404 = vmatprep.subr.mxu0 0.0
        %405 = vmatpush1.msra.mxu0 %v383
        %406 = vmatprep.subr.mxu0 0.0
        %407 = vmatpush1.msra.mxu0 %v384
        %408 = vmatprep.subr.mxu0 0.0
        %409 = vmatpush1.msra.mxu0 %v385
        %410 = vmatprep.subr.mxu0 0.0
        %411 = vmatpush1.msra.mxu0 %v386
        %412 = vmatprep.subr.mxu0 0.0
        %413 = vmatpush1.msra.mxu0 %v387
        %414 = vmatprep.subr.mxu0 0.0
        %415 = vmatpush1.msra.mxu0 %v388
        %416 = vmatprep.subr.mxu0 0.0
        %417 = vmatpush1.msra.mxu0 %v389
        %418 = vmatprep.subr.mxu0 0.0
        %419 = vmatpush1.msra.mxu0 %v390
        %420 = vmatprep.subr.mxu0 0.0
        %421 = vmatpush1.msra.mxu0 %v391
        %422 = vmatprep.subr.mxu0 0.0
        %423 = vmatpush1.msra.mxu0 %v392
        %424 = vmatprep.subr.mxu0 0.0
        %425 = vmatpush1.msra.mxu0 %v393
        %426 = vmatprep.subr.mxu0 0.0
        %427 = vmatpush1.msra.mxu0 0.0
        %428 = vmatprep.subr.mxu0 0.0
        %429 = vmatpush1.msra.mxu0 0.0
        %430 = vmatprep.subr.mxu0 0.0
        %431 = vmatpush1.msra.mxu0 0.0
        %432 = vmatprep.subr.mxu0 0.0
        %433 = vmatpush1.msra.mxu0 0.0
        %434 = vmatprep.subr.mxu0 0.0
        %435 = vmatpush1.msra.mxu0 0.0
        %436 = vmatprep.subr.mxu0 0.0
        %437 = vmatpush1.msra.mxu0 0.0
        %438 = vmatprep.subr.mxu0 0.0
        %439 = vmatpush1.msra.mxu0 0.0
        %440 = vmatprep.subr.mxu0 0.0
        %441 = vmatpush1.msra.mxu0 0.0
        %442 = vmatprep.subr.mxu0 0.0
        %443 = vmatpush1.msra.mxu0 0.0
        %444 = vmatprep.subr.mxu0 0.0
        %445 = vmatpush1.msra.mxu0 0.0
        %446 = vmatprep.subr.mxu0 0.0
        %447 = vmatpush1.msra.mxu0 0.0
        %448 = vmatprep.subr.mxu0 0.0
        %449 = vmatpush1.msra.mxu0 0.0
        %450 = vmatprep.subr.mxu0 0.0
        %451 = vmatpush1.msra.mxu0 0.0
        %452 = vmatprep.subr.mxu0 0.0
        %453 = vmatpush1.msra.mxu0 0.0
        %454 = vmatprep.subr.mxu0 0.0
        %455 = vmatpush1.msra.mxu0 0.0
        %456 = vmatprep.subr.mxu0 0.0
        %457 = vmatpush1.msra.mxu0 0.0
        %458 = vmatprep.mubr.f32.mxu0 0.0
        %459 = vmatmul.mubr.f32.gmra.mrb[0].mxu0 %v362
        %v460 = vpop.f32.mrb[0].mxu0
        %v461 = vadd.f32 0.0, %v460
        %v462 = vpop.f32.mrb[0].mxu0
        %463 = vmatprep.mubr.f32.mxu0 0.0
        %464 = vmatmul.mubr.f32.gmra.mrb[0].mxu0 %v363
        %v465 = vpop.f32.mrb[0].mxu0
        %v466 = vadd.f32 0.0, %v465
        %v467 = vpop.f32.mrb[0].mxu0
        %468 = vmatprep.mubr.f32.mxu0 0.0
        %469 = vmatmul.mubr.f32.gmra.mrb[0].mxu0 %v364
        %v470 = vpop.f32.mrb[0].mxu0
        %v471 = vadd.f32 0.0, %v470
        %v472 = vpop.f32.mrb[0].mxu0
        %473 = vmatprep.mubr.f32.mxu0 0.0
        %474 = vmatmul.mubr.f32.gmra.mrb[0].mxu0 %v365
        %v475 = vpop.f32.mrb[0].mxu0
        %v476 = vadd.f32 0.0, %v475
        %v477 = vpop.f32.mrb[0].mxu0
        %478 = vmatprep.mubr.f32.mxu0 0.0
        %479 = vmatmul.mubr.f32.gmra.mrb[0].mxu0 %v366
        %v480 = vpop.f32.mrb[0].mxu0
        %v481 = vadd.f32 0.0, %v480
        %v482 = vpop.f32.mrb[0].mxu0
        %483 = vmatprep.mubr.f32.mxu0 0.0
        %484 = vmatmul.mubr.f32.gmra.mrb[0].mxu0 %v367
        %v485 = vpop.f32.mrb[0].mxu0
        %v486 = vadd.f32 0.0, %v485
        %v487 = vpop.f32.mrb[0].mxu0
        %488 = vmatprep.mubr.f32.mxu0 0.0
        %489 = vmatmul.mubr.f32.gmra.mrb[0].mxu0 %v368
        %v490 = vpop.f32.mrb[0].mxu0
        %v491 = vadd.f32 0.0, %v490
        %v492 = vpop.f32.mrb[0].mxu0
        %493 = vmatprep.mubr.f32.mxu0 0.0
        %494 = vmatmul.mubr.f32.gmra.mrb[0].mxu0 %v369
        %v495 = vpop.f32.mrb[0].mxu0
        %v496 = vadd.f32 0.0, %v495
        %v497 = vpop.f32.mrb[0].mxu0
        %498 = vmatprep.mubr.f32.mxu0 0.0
        %499 = vmatmul.mubr.f32.gmra.mrb[0].mxu0 %v370
        %v500 = vpop.f32.mrb[0].mxu0
        %v501 = vadd.f32 0.0, %v500
        %v502 = vpop.f32.mrb[0].mxu0
        %503 = vmatprep.mubr.f32.mxu0 0.0
        %504 = vmatmul.mubr.f32.gmra.mrb[0].mxu0 %v371
        %v505 = vpop.f32.mrb[0].mxu0
        %v506 = vadd.f32 0.0, %v505
        %v507 = vpop.f32.mrb[0].mxu0
        %508 = vmatprep.mubr.f32.mxu0 0.0
        %509 = vmatmul.mubr.f32.gmra.mrb[0].mxu0 %v372
        %v510 = vpop.f32.mrb[0].mxu0
        %v511 = vadd.f32 0.0, %v510
        %v512 = vpop.f32.mrb[0].mxu0
        %513 = vmatprep.mubr.f32.mxu0 0.0
        %514 = vmatmul.mubr.f32.gmra.mrb[0].mxu0 %v373
        %v515 = vpop.f32.mrb[0].mxu0
        %v516 = vadd.f32 0.0, %v515
        %v517 = vpop.f32.mrb[0].mxu0
        %518 = vmatprep.mubr.f32.mxu0 0.0
        %519 = vmatmul.mubr.f32.gmra.mrb[0].mxu0 %v374
        %v520 = vpop.f32.mrb[0].mxu0
        %v521 = vadd.f32 0.0, %v520
        %v522 = vpop.f32.mrb[0].mxu0
        %523 = vmatprep.mubr.f32.mxu0 0.0
        %524 = vmatmul.mubr.f32.gmra.mrb[0].mxu0 %v375
        %v525 = vpop.f32.mrb[0].mxu0
        %v526 = vadd.f32 0.0, %v525
        %v527 = vpop.f32.mrb[0].mxu0
        %528 = vmatprep.mubr.f32.mxu0 0.0
        %529 = vmatmul.mubr.f32.gmra.mrb[0].mxu0 %v376
        %v530 = vpop.f32.mrb[0].mxu0
        %v531 = vadd.f32 0.0, %v530
        %v532 = vpop.f32.mrb[0].mxu0
        %533 = vmatprep.mubr.f32.mxu0 0.0
        %534 = vmatmul.mubr.f32.gmra.mrb[0].mxu0 %v377
        %v535 = vpop.f32.mrb[0].mxu0
        %v536 = vadd.f32 0.0, %v535
        %v537 = vpop.f32.mrb[0].mxu0
        %538 = vdwg.mxu0
        %v539 = vadd.f32 %v346, %v461
        %v540 = vadd.f32 %v347, %v466
        %v541 = vadd.f32 %v348, %v471
        %v542 = vadd.f32 %v349, %v476
        %v543 = vadd.f32 %v350, %v481
        %v544 = vadd.f32 %v351, %v486
        %v545 = vadd.f32 %v352, %v491
        %v546 = vadd.f32 %v353, %v496
        %v547 = vadd.f32 %v354, %v501
        %v548 = vadd.f32 %v355, %v506
        %v549 = vadd.f32 %v356, %v511
        %v550 = vadd.f32 %v357, %v516
        %v551 = vadd.f32 %v358, %v521
        %v552 = vadd.f32 %v359, %v526
        %v553 = vadd.f32 %v360, %v531
        %v554 = vadd.f32 %v361, %v536
        %555 = vst [vmem:[#allocation2] sm:$0xff] %v539
        %556 = vst [vmem:[#allocation2 + $0x8] sm:$0xff] %v540
        %557 = vst [vmem:[#allocation2 + $0x10] sm:$0xff] %v541
        %558 = vst [vmem:[#allocation2 + $0x18] sm:$0xff] %v542
        %559 = vst [vmem:[#allocation2 + $0x20] sm:$0xff] %v543
        %560 = vst [vmem:[#allocation2 + $0x28] sm:$0xff] %v544
        %561 = vst [vmem:[#allocation2 + $0x30] sm:$0xff] %v545
        %562 = vst [vmem:[#allocation2 + $0x38] sm:$0xff] %v546
        %563 = vst [vmem:[#allocation2 + $0x40] sm:$0xff] %v547
        %564 = vst [vmem:[#allocation2 + $0x48] sm:$0xff] %v548
        %565 = vst [vmem:[#allocation2 + $0x50] sm:$0xff] %v549
        %566 = vst [vmem:[#allocation2 + $0x58] sm:$0xff] %v550
        %567 = vst [vmem:[#allocation2 + $0x60] sm:$0xff] %v551
        %568 = vst [vmem:[#allocation2 + $0x68] sm:$0xff] %v552
        %569 = vst [vmem:[#allocation2 + $0x70] sm:$0xff] %v553
        %570 = vst [vmem:[#allocation2 + $0x78] sm:$0xff] %v554
        // Predicated region
        $region53: #{tpu_custom_call.1} parent=39 // pred_check
          %p571 = pneg %p326
        $region54: #{tpu_custom_call.1} parent=39 // pred_check_branch
          %573 = sbr.rel (%p571) target = $region56
        $region55: #{tpu_custom_call.1} parent=39 // pred_region
          %v574 = vld [vmem:[#allocation2] sm:$0xff]
          %v575 = vld [vmem:[#allocation2 + $0x8] sm:$0xff]
          %v576 = vld [vmem:[#allocation2 + $0x10] sm:$0xff]
          %v577 = vld [vmem:[#allocation2 + $0x18] sm:$0xff]
          %v578 = vld [vmem:[#allocation2 + $0x20] sm:$0xff]
          %v579 = vld [vmem:[#allocation2 + $0x28] sm:$0xff]
          %v580 = vld [vmem:[#allocation2 + $0x30] sm:$0xff]
          %v581 = vld [vmem:[#allocation2 + $0x38] sm:$0xff]
          %v582 = vld [vmem:[#allocation2 + $0x40] sm:$0xff]
          %v583 = vld [vmem:[#allocation2 + $0x48] sm:$0xff]
          %v584 = vld [vmem:[#allocation2 + $0x50] sm:$0xff]
          %v585 = vld [vmem:[#allocation2 + $0x58] sm:$0xff]
          %v586 = vld [vmem:[#allocation2 + $0x60] sm:$0xff]
          %v587 = vld [vmem:[#allocation2 + $0x68] sm:$0xff]
          %v588 = vld [vmem:[#allocation2 + $0x70] sm:$0xff]
          %v589 = vld [vmem:[#allocation2 + $0x78] sm:$0xff]
          %v590 = vld [vmem:[%s2] sm:$0x1]
          %v592 = vlaneseq
          %v593 = vshrl.u32 %v592, 7
          %v594 = vsub.s32 0, %v593
          %v595 = vrot.slane %v590, %v594
          %v597 = vadd.f32 %v574, %v595
          %v598 = vadd.f32 %v575, %v595
          %v599 = vadd.f32 %v576, %v595
          %v600 = vadd.f32 %v577, %v595
          %v601 = vadd.f32 %v578, %v595
          %v602 = vadd.f32 %v579, %v595
          %v603 = vadd.f32 %v580, %v595
          %v604 = vadd.f32 %v581, %v595
          %v605 = vadd.f32 %v582, %v595
          %v606 = vadd.f32 %v583, %v595
          %v607 = vadd.f32 %v584, %v595
          %v608 = vadd.f32 %v585, %v595
          %v609 = vadd.f32 %v586, %v595
          %v610 = vadd.f32 %v587, %v595
          %v611 = vadd.f32 %v588, %v595
          %v612 = vadd.f32 %v589, %v595
          %vm613 = vcmp.ge.f32.partialorder %v597, 0.0
          %vm614 = vcmp.ge.f32.partialorder %v598, 0.0
          %vm615 = vcmp.ge.f32.partialorder %v599, 0.0
          %vm616 = vcmp.ge.f32.partialorder %v600, 0.0
          %vm617 = vcmp.ge.f32.partialorder %v601, 0.0
          %vm618 = vcmp.ge.f32.partialorder %v602, 0.0
          %vm619 = vcmp.ge.f32.partialorder %v603, 0.0
          %vm620 = vcmp.ge.f32.partialorder %v604, 0.0
          %vm621 = vcmp.ge.f32.partialorder %v605, 0.0
          %vm622 = vcmp.ge.f32.partialorder %v606, 0.0
          %vm623 = vcmp.ge.f32.partialorder %v607, 0.0
          %vm624 = vcmp.ge.f32.partialorder %v608, 0.0
          %vm625 = vcmp.ge.f32.partialorder %v609, 0.0
          %vm626 = vcmp.ge.f32.partialorder %v610, 0.0
          %vm627 = vcmp.ge.f32.partialorder %v611, 0.0
          %vm628 = vcmp.ge.f32.partialorder %v612, 0.0
          %v629 = vmul.f32 %v597, 0.01
          %v630 = vmul.f32 %v598, 0.01
          %v631 = vmul.f32 %v599, 0.01
          %v632 = vmul.f32 %v600, 0.01
          %v633 = vmul.f32 %v601, 0.01
          %v634 = vmul.f32 %v602, 0.01
          %v635 = vmul.f32 %v603, 0.01
          %v636 = vmul.f32 %v604, 0.01
          %v637 = vmul.f32 %v605, 0.01
          %v638 = vmul.f32 %v606, 0.01
          %v639 = vmul.f32 %v607, 0.01
          %v640 = vmul.f32 %v608, 0.01
          %v641 = vmul.f32 %v609, 0.01
          %v642 = vmul.f32 %v610, 0.01
          %v643 = vmul.f32 %v611, 0.01
          %v644 = vmul.f32 %v612, 0.01
          %v645 = vsel %vm613, %v597, %v629
          %v646 = vsel %vm614, %v598, %v630
          %v647 = vsel %vm615, %v599, %v631
          %v648 = vsel %vm616, %v600, %v632
          %v649 = vsel %vm617, %v601, %v633
          %v650 = vsel %vm618, %v602, %v634
          %v651 = vsel %vm619, %v603, %v635
          %v652 = vsel %vm620, %v604, %v636
          %v653 = vsel %vm621, %v605, %v637
          %v654 = vsel %vm622, %v606, %v638
          %v655 = vsel %vm623, %v607, %v639
          %v656 = vsel %vm624, %v608, %v640
          %v657 = vsel %vm625, %v609, %v641
          %v658 = vsel %vm626, %v610, %v642
          %v659 = vsel %vm627, %v611, %v643
          %v660 = vsel %vm628, %v612, %v644
          %661 = vst [vmem:[%s309] sm:$0xff] %v645
          %662 = vst [vmem:[%s309 + $0x8] sm:$0xff] %v646
          %663 = vst [vmem:[%s309 + $0x10] sm:$0xff] %v647
          %664 = vst [vmem:[%s309 + $0x18] sm:$0xff] %v648
          %665 = vst [vmem:[%s309 + $0x20] sm:$0xff] %v649
          %666 = vst [vmem:[%s309 + $0x28] sm:$0xff] %v650
          %667 = vst [vmem:[%s309 + $0x30] sm:$0xff] %v651
          %668 = vst [vmem:[%s309 + $0x38] sm:$0xff] %v652
          %669 = vst [vmem:[%s309 + $0x40] sm:$0xff] %v653
          %670 = vst [vmem:[%s309 + $0x48] sm:$0xff] %v654
          %671 = vst [vmem:[%s309 + $0x50] sm:$0xff] %v655
          %672 = vst [vmem:[%s309 + $0x58] sm:$0xff] %v656
          %673 = vst [vmem:[%s309 + $0x60] sm:$0xff] %v657
          %674 = vst [vmem:[%s309 + $0x68] sm:$0xff] %v658
          %675 = vst [vmem:[%s309 + $0x70] sm:$0xff] %v659
          %676 = vst [vmem:[%s309 + $0x78] sm:$0xff] %v660
          %v677 = vld [vmem:[%s3] sm:$0x1]
          %v679 = vlaneseq
          %v680 = vshrl.u32 %v679, 7
          %v681 = vsub.s32 0, %v680
          %v682 = vrot.slane %v677, %v681
          %v684 = vmul.f32 %v645, %v682
          %v685 = vmul.f32 %v646, %v682
          %v686 = vmul.f32 %v647, %v682
          %v687 = vmul.f32 %v648, %v682
          %v688 = vmul.f32 %v649, %v682
          %v689 = vmul.f32 %v650, %v682
          %v690 = vmul.f32 %v651, %v682
          %v691 = vmul.f32 %v652, %v682
          %v692 = vmul.f32 %v653, %v682
          %v693 = vmul.f32 %v654, %v682
          %v694 = vmul.f32 %v655, %v682
          %v695 = vmul.f32 %v656, %v682
          %v696 = vmul.f32 %v657, %v682
          %v697 = vmul.f32 %v658, %v682
          %v698 = vmul.f32 %v659, %v682
          %v699 = vmul.f32 %v660, %v682
          %700 = vadd.xlane.f32.xlu0 %v684
          %v701 = vpop.xlane.xlu0 %700
          %702 = vadd.xlane.f32.xlu0 %v685
          %v703 = vpop.xlane.xlu0 %702
          %704 = vadd.xlane.f32.xlu0 %v686
          %v705 = vpop.xlane.xlu0 %704
          %706 = vadd.xlane.f32.xlu0 %v687
          %v707 = vpop.xlane.xlu0 %706
          %708 = vadd.xlane.f32.xlu0 %v688
          %v709 = vpop.xlane.xlu0 %708
          %710 = vadd.xlane.f32.xlu0 %v689
          %v711 = vpop.xlane.xlu0 %710
          %712 = vadd.xlane.f32.xlu0 %v690
          %v713 = vpop.xlane.xlu0 %712
          %714 = vadd.xlane.f32.xlu0 %v691
          %v715 = vpop.xlane.xlu0 %714
          %716 = vadd.xlane.f32.xlu0 %v692
          %v717 = vpop.xlane.xlu0 %716
          %718 = vadd.xlane.f32.xlu0 %v693
          %v719 = vpop.xlane.xlu0 %718
          %720 = vadd.xlane.f32.xlu0 %v694
          %v721 = vpop.xlane.xlu0 %720
          %722 = vadd.xlane.f32.xlu0 %v695
          %v723 = vpop.xlane.xlu0 %722
          %724 = vadd.xlane.f32.xlu0 %v696
          %v725 = vpop.xlane.xlu0 %724
          %726 = vadd.xlane.f32.xlu0 %v697
          %v727 = vpop.xlane.xlu0 %726
          %728 = vadd.xlane.f32.xlu0 %v698
          %v729 = vpop.xlane.xlu0 %728
          %730 = vadd.xlane.f32.xlu0 %v699
          %v731 = vpop.xlane.xlu0 %730
          %s732 = sld [smem:[#allocation3]]
          %v733 = vstv %s732
          %v734 = vadd.f32 %v701, %v733
          %v735 = vadd.f32 %v703, %v733
          %v736 = vadd.f32 %v705, %v733
          %v737 = vadd.f32 %v707, %v733
          %v738 = vadd.f32 %v709, %v733
          %v739 = vadd.f32 %v711, %v733
          %v740 = vadd.f32 %v713, %v733
          %v741 = vadd.f32 %v715, %v733
          %v742 = vadd.f32 %v717, %v733
          %v743 = vadd.f32 %v719, %v733
          %v744 = vadd.f32 %v721, %v733
          %v745 = vadd.f32 %v723, %v733
          %v746 = vadd.f32 %v725, %v733
          %v747 = vadd.f32 %v727, %v733
          %v748 = vadd.f32 %v729, %v733
          %v749 = vadd.f32 %v731, %v733
          %v750 = vxor.u32 %v734, 2147483648
          %v751 = vxor.u32 %v735, 2147483648
          %v752 = vxor.u32 %v736, 2147483648
          %v753 = vxor.u32 %v737, 2147483648
          %v754 = vxor.u32 %v738, 2147483648
          %v755 = vxor.u32 %v739, 2147483648
          %v756 = vxor.u32 %v740, 2147483648
          %v757 = vxor.u32 %v741, 2147483648
          %v758 = vxor.u32 %v742, 2147483648
          %v759 = vxor.u32 %v743, 2147483648
          %v760 = vxor.u32 %v744, 2147483648
          %v761 = vxor.u32 %v745, 2147483648
          %v762 = vxor.u32 %v746, 2147483648
          %v763 = vxor.u32 %v747, 2147483648
          %v764 = vxor.u32 %v748, 2147483648
          %v765 = vxor.u32 %v749, 2147483648
          %v766 = vmul.f32 %v750, 1.442695
          %v767 = vpow.pop %v766
          %v768 = vmul.f32 %v751, 1.442695
          %v769 = vpow.pop %v768
          %v770 = vmul.f32 %v752, 1.442695
          %v771 = vpow.pop %v770
          %v772 = vmul.f32 %v753, 1.442695
          %v773 = vpow.pop %v772
          %v774 = vmul.f32 %v754, 1.442695
          %v775 = vpow.pop %v774
          %v776 = vmul.f32 %v755, 1.442695
          %v777 = vpow.pop %v776
          %v778 = vmul.f32 %v756, 1.442695
          %v779 = vpow.pop %v778
          %v780 = vmul.f32 %v757, 1.442695
          %v781 = vpow.pop %v780
          %v782 = vmul.f32 %v758, 1.442695
          %v783 = vpow.pop %v782
          %v784 = vmul.f32 %v759, 1.442695
          %v785 = vpow.pop %v784
          %v786 = vmul.f32 %v760, 1.442695
          %v787 = vpow.pop %v786
          %v788 = vmul.f32 %v761, 1.442695
          %v789 = vpow.pop %v788
          %v790 = vmul.f32 %v762, 1.442695
          %v791 = vpow.pop %v790
          %v792 = vmul.f32 %v763, 1.442695
          %v793 = vpow.pop %v792
          %v794 = vmul.f32 %v764, 1.442695
          %v795 = vpow.pop %v794
          %v796 = vmul.f32 %v765, 1.442695
          %v797 = vpow.pop %v796
          %v798 = vadd.f32 %v767, 1.0
          %v799 = vadd.f32 %v769, 1.0
          %v800 = vadd.f32 %v771, 1.0
          %v801 = vadd.f32 %v773, 1.0
          %v802 = vadd.f32 %v775, 1.0
          %v803 = vadd.f32 %v777, 1.0
          %v804 = vadd.f32 %v779, 1.0
          %v805 = vadd.f32 %v781, 1.0
          %v806 = vadd.f32 %v783, 1.0
          %v807 = vadd.f32 %v785, 1.0
          %v808 = vadd.f32 %v787, 1.0
          %v809 = vadd.f32 %v789, 1.0
          %v810 = vadd.f32 %v791, 1.0
          %v811 = vadd.f32 %v793, 1.0
          %v812 = vadd.f32 %v795, 1.0
          %v813 = vadd.f32 %v797, 1.0
          %v814 = vrcp.pop %v798
          %v815 = vmul.f32 1.0, %v814
          %v816 = vrcp.pop %v799
          %v817 = vmul.f32 1.0, %v816
          %v818 = vrcp.pop %v800
          %v819 = vmul.f32 1.0, %v818
          %v820 = vrcp.pop %v801
          %v821 = vmul.f32 1.0, %v820
          %v822 = vrcp.pop %v802
          %v823 = vmul.f32 1.0, %v822
          %v824 = vrcp.pop %v803
          %v825 = vmul.f32 1.0, %v824
          %v826 = vrcp.pop %v804
          %v827 = vmul.f32 1.0, %v826
          %v828 = vrcp.pop %v805
          %v829 = vmul.f32 1.0, %v828
          %v830 = vrcp.pop %v806
          %v831 = vmul.f32 1.0, %v830
          %v832 = vrcp.pop %v807
          %v833 = vmul.f32 1.0, %v832
          %v834 = vrcp.pop %v808
          %v835 = vmul.f32 1.0, %v834
          %v836 = vrcp.pop %v809
          %v837 = vmul.f32 1.0, %v836
          %v838 = vrcp.pop %v810
          %v839 = vmul.f32 1.0, %v838
          %v840 = vrcp.pop %v811
          %v841 = vmul.f32 1.0, %v840
          %v842 = vrcp.pop %v812
          %v843 = vmul.f32 1.0, %v842
          %v844 = vrcp.pop %v813
          %v845 = vmul.f32 1.0, %v844
          %vm846 = vcmask 7168
          %847 = vst.msk [vmem:[%s324] sm:$0xff] %vm846, %v815
          %848 = vst.msk [vmem:[%s324 + $0x8] sm:$0xff] %vm846, %v817
          %849 = vst.msk [vmem:[%s324 + $0x10] sm:$0xff] %vm846, %v819
          %850 = vst.msk [vmem:[%s324 + $0x18] sm:$0xff] %vm846, %v821
          %851 = vst.msk [vmem:[%s324 + $0x20] sm:$0xff] %vm846, %v823
          %852 = vst.msk [vmem:[%s324 + $0x28] sm:$0xff] %vm846, %v825
          %853 = vst.msk [vmem:[%s324 + $0x30] sm:$0xff] %vm846, %v827
          %854 = vst.msk [vmem:[%s324 + $0x38] sm:$0xff] %vm846, %v829
          %855 = vst.msk [vmem:[%s324 + $0x40] sm:$0xff] %vm846, %v831
          %856 = vst.msk [vmem:[%s324 + $0x48] sm:$0xff] %vm846, %v833
          %857 = vst.msk [vmem:[%s324 + $0x50] sm:$0xff] %vm846, %v835
          %858 = vst.msk [vmem:[%s324 + $0x58] sm:$0xff] %vm846, %v837
          %859 = vst.msk [vmem:[%s324 + $0x60] sm:$0xff] %vm846, %v839
          %860 = vst.msk [vmem:[%s324 + $0x68] sm:$0xff] %vm846, %v841
          %861 = vst.msk [vmem:[%s324 + $0x70] sm:$0xff] %vm846, %v843
          %862 = vst.msk [vmem:[%s324 + $0x78] sm:$0xff] %vm846, %v845
        $region56: #{tpu_custom_call.1} parent=39 // pred_fallthru
          _
        %s863 = sand.u32 %s163, 1
        %s864 = scalar_lea.sflag [#allocation6], %s863
        %s865 = sand.u32 %s163, 1
        %s866 = smul.addr %s865, 128
        %s867 = scalar_lea.vmem [#allocation9], %s866
        %s868 = smul.u32 16, %s30
        %p869 = scmp.lt.s32.totalorder %s868, 31
        %s870 = scalar_select %p869, %s868, 31
        %s871 = smul.addr %s870, 8
        %s872 = scalar_lea.vmem %s6, %s871
        // Predicated region
        $region57: #{tpu_custom_call.1} parent=39 // pred_check
          %p873 = pneg %p173
        $region58: #{tpu_custom_call.1} parent=39 // pred_check_branch
          %875 = sbr.rel (%p873) target = $region60
        $region59: #{tpu_custom_call.1} parent=39 // pred_region
          %s876 = smul.u32 16, %s30
          %s878 = ssub.s32 2048, 2048
          %879 = vsyncadd %s864, %s878
          %s880 = smul.addr %s876, 128
          %s881 = scalar_lea.hbm %s5, %s880
          %s882 = sshll.u32 %s867, 4
          %s883 = int_to_ptr.vmem [resolvable:$true] %s882
          %888 = dma.vmem_to_hbm [thread:$0]  %s883, 2048, %s881, %s864, 128, 128, 8
        $region60: #{tpu_custom_call.1} parent=39 // pred_fallthru
          _
        // Predicated region
        $region61: #{tpu_custom_call.1} parent=39 // pred_check
          %p889 = pneg %p199
        $region62: #{tpu_custom_call.1} parent=39 // pred_check_branch
          %891 = sbr.rel (%p889) target = $region64
        $region63: #{tpu_custom_call.1} parent=39 // pred_region
          %s892 = smul.u32 16, %s30
        $region64: #{tpu_custom_call.1} parent=39 // pred_fallthru
          _
      $region40: #{tpu_custom_call.1} parent=5 // pred_fallthru
        _
      %p893 = scmp.le.s32.totalorder 2, %s21
      // Predicated region
      $region65: #{tpu_custom_call.1} parent=5 // pred_check
        %p894 = pneg %p893
      $region66: #{tpu_custom_call.1} parent=5 // pred_check_branch
        %896 = sbr.rel (%p894) target = $region68
      $region67: #{tpu_custom_call.1} parent=5 // pred_region
        %s897 = ssub.s32 %s21, 2
        // Predicated region
        $region69: #{tpu_custom_call.1} parent=67 // pred_check
          %p898 = pneg %p179
        $region70: #{tpu_custom_call.1} parent=67 // pred_check_branch
          %900 = sbr.rel (%p898) target = $region72
        $region71: #{tpu_custom_call.1} parent=67 // pred_region
          %s901 = sand.u32 %s164, 1
          %s902 = scalar_lea.sflag [#allocation6], %s901
          %s903 = sand.u32 %s164, 1
          %s904 = smul.addr %s903, 128
          %s905 = scalar_lea.vmem [#allocation9], %s904
          %906 = dma.done %s902, 2048
        $region72: #{tpu_custom_call.1} parent=67 // pred_fallthru
          _
        // Predicated region
        $region73: #{tpu_custom_call.1} parent=67 // pred_check
          %p907 = pneg %p205
        $region74: #{tpu_custom_call.1} parent=67 // pred_check_branch
          %909 = sbr.rel (%p907) target = $region76
        $region75: #{tpu_custom_call.1} parent=67 // pred_region
          %s910 = smul.u32 16, %s32
          %p911 = scmp.lt.s32.totalorder %s910, 31
          %s912 = scalar_select %p911, %s910, 31
          %s913 = smul.addr %s912, 8
          %s914 = scalar_lea.vmem %s6, %s913
        $region76: #{tpu_custom_call.1} parent=67 // pred_fallthru
          _
      $region68: #{tpu_custom_call.1} parent=5 // pred_fallthru
        _
    $region6: #{tpu_custom_call.1} parent=1 // loop_footer
      %s25 = sadd.s32 1, %s21
    $region7: #{tpu_custom_call.1} parent=1 // loop_footer_branch
      %20 = sbr.rel target = $region3
    $region8: #{tpu_custom_call.1} parent=1 // loop_exit
      _
    %915 = vsyncpa [#allocation5], 1
    %s916 = scalar_lea.sflag [#allocation5], 1
    %917 = vsyncpa %s916, 1
    %918 = vsyncpa [#allocation8], 1
    %919 = vsyncpa [#allocation6], 1
    %s920 = scalar_lea.sflag [#allocation6], 1
    %921 = vsyncpa %s920, 1

</llo_original>
